<compile_context>
chip_gen: v5e
topology: v5e:2x2
jax: 0.10.0
libtpu: 0.0.40
codegen_flags: <defaults>
</compile_context>

<pallas_src>
import math

import jax
import jax.numpy as jnp
import numpy as np
from jax.experimental import pallas as pl
from jax.experimental.pallas import tpu as pltpu


def _round_up(x, m):
    return (x + m - 1) // m * m


def _default_tile_r_max():
    """2048-row tiles on 128-MiB-VMEM parts (v5e/v6e), 1024 on 64-MiB v7x."""
    try:
        vmem = pltpu.get_tpu_info().vmem_capacity_bytes
    except Exception:
        vmem = 64 * 1024 * 1024          # conservative (v7x-sized) fallback
    return 2048 if vmem >= 96 * 1024 * 1024 else 1024


def _choose_tile_r(R, tile_r_max, min_steps=8):
    """Largest multiple-of-8 divisor of R (<= tile_r_max); prefer >= min_steps grid steps."""
    cands = [d for d in range(8, min(R, tile_r_max) + 1, 8) if R % d == 0]
    if not cands:
        return None                       # caller falls back to row padding
    good = [d for d in cands if R // d >= min_steps]
    return max(good) if good else max(cands)


# ----------------------------- Pallas kernels --------------------------------
def _layernorm(y, gamma, beta, out_dtype):
    # Two-pass LayerNorm over the embedding dim, f32 stats, EUP rsqrt.
    inv_e = 1.0 / y.shape[-1]
    mean = jnp.sum(y, axis=-1, keepdims=True) * inv_e
    centered = y - mean
    var = jnp.sum(centered * centered, axis=-1, keepdims=True) * inv_e
    inv_std = jax.lax.rsqrt(var + 1e-5)   # nn.LayerNorm default eps
    return (centered * inv_std * gamma + beta).astype(out_dtype)


def _proj_ln_kernel_folded(patches_ref, w_ref, gamma_ref, beta_ref, o_ref):
    # patches: (TILE_R, Kp) bf16  w: (Kp, E) bf16 (bias folded as a weight row)
    y = jnp.dot(patches_ref[...], w_ref[...], preferred_element_type=jnp.float32)
    o_ref[...] = _layernorm(y, gamma_ref[...], beta_ref[...], o_ref.dtype)


def _proj_ln_kernel_bias(patches_ref, w_ref, bias_ref, gamma_ref, beta_ref, o_ref):
    # Same as above but with an explicit f32 bias add (K had no free padded lane).
    y = jnp.dot(patches_ref[...], w_ref[...], preferred_element_type=jnp.float32)
    y = y + bias_ref[...]
    o_ref[...] = _layernorm(y, gamma_ref[...], beta_ref[...], o_ref.dtype)


def _proj_layernorm(patches, w, gamma, beta, *, tile_r, bias=None,
                    out_dtype=jnp.float32, vmem_limit_bytes=32 * 1024 * 1024):
    """patches: (Rp, Kp)  w: (Kp, E)  bias/gamma/beta: (1, E)  ->  (Rp, E)."""
    Rp, Kp = patches.shape
    E = w.shape[1]
    assert Rp % tile_r == 0
    grid = (Rp // tile_r,)

    in_specs = [
        pl.BlockSpec((tile_r, Kp), lambda i: (i, 0)),   # streamed row tiles
        pl.BlockSpec((Kp, E), lambda i: (0, 0)),        # resident weight
    ]
    inputs = [patches, w]
    if bias is not None:
        in_specs.append(pl.BlockSpec((1, E), lambda i: (0, 0)))   # resident bias
        inputs.append(bias)
    in_specs += [pl.BlockSpec((1, E), lambda i: (0, 0)),          # resident gamma
                 pl.BlockSpec((1, E), lambda i: (0, 0))]          # resident beta
    inputs += [gamma, beta]
    kernel = _proj_ln_kernel_bias if bias is not None else _proj_ln_kernel_folded

    return pl.pallas_call(
        kernel,
        out_shape=jax.ShapeDtypeStruct((Rp, E), out_dtype),
        grid=grid,
        in_specs=in_specs,
        out_specs=pl.BlockSpec((tile_r, E), lambda i: (i, 0)),
        compiler_params=pltpu.CompilerParams(
            dimension_semantics=("parallel",),   # independent row tiles (2 TCs on v7x)
            vmem_limit_bytes=int(vmem_limit_bytes),
        ),
    )(*inputs)


# ------------------------------ Module wrapper -------------------------------
class OverlapPatchEmbed:
    """JAX/Pallas port of PVTv2 OverlapPatchEmbed (Conv2d proj + flatten + LayerNorm)."""

    def __init__(self, img_size=224, patch_size=7, stride=4, in_chans=3,
                 embed_dim=768, key=None, compute_dtype=jnp.bfloat16,
                 out_dtype=jnp.float32, tile_r_max=None):
        self.img_size = (img_size, img_size)
        self.patch_size = (patch_size, patch_size)
        self.stride = (stride, stride)
        self.in_chans = in_chans
        self.embed_dim = embed_dim
        self.padding = (patch_size // 2, patch_size // 2)
        self.compute_dtype = compute_dtype
        self.out_dtype = out_dtype
        self.tile_r_max = int(tile_r_max) if tile_r_max else _default_tile_r_max()

        if key is None:
            key = jax.random.PRNGKey(0)
        kw_key, kb_key = jax.random.split(key)
        fan_in = in_chans * patch_size * patch_size
        bound = 1.0 / math.sqrt(fan_in)
        # Conv2d weight: (E, C, kh, kw), bias: (E,)  (PyTorch default-ish init)
        self.proj_w = jax.random.uniform(
            kw_key, (embed_dim, in_chans, patch_size, patch_size),
            minval=-bound, maxval=bound, dtype=jnp.float32)
        self.proj_b = jax.random.uniform(
            kb_key, (embed_dim,), minval=-bound, maxval=bound, dtype=jnp.float32)
        # LayerNorm params
        self.ln_gamma = jnp.ones((embed_dim,), jnp.float32)
        self.ln_beta = jnp.zeros((embed_dim,), jnp.float32)

    def __call__(self, x):
        # x: (B, C, H, W)  NCHW, as in PyTorch
        B, C, H, W = x.shape
        kh, kw = self.patch_size
        sh, sw = self.stride
        ph, pw = self.padding
        Ho = (H + 2 * ph - kh) // sh + 1
        Wo = (W + 2 * pw - kw) // sw + 1
        K = C * kh * kw
        E = self.embed_dim
        R = B * Ho * Wo

        # --- im2col in bf16 (cast *before* the patch extraction so the (R, K)
        # intermediate materializes at half the bytes; values are exact copies).
        x_c = x.astype(self.compute_dtype)
        patches = jax.lax.conv_general_dilated_patches(
            x_c,
            filter_shape=(kh, kw),
            window_strides=(sh, sw),
            padding=[(ph, ph), (pw, pw)],
            dimension_numbers=("NCHW", "OIHW", "NHWC"),
        )  # (B, Ho, Wo, K), feature order (c, i, j) with c slowest == Conv2d weight layout
        patches = patches.reshape(R, K)

        # --- lane-dense contraction dim; fold the conv bias into a free padded lane.
        Kp = _round_up(K, 128)
        fold_bias = Kp > K
        pad_cols = Kp - K - (1 if fold_bias else 0)
        cols = [patches]
        if fold_bias:
            cols.append(jnp.ones((R, 1), self.compute_dtype))       # bias lane
        if pad_cols > 0:
            cols.append(jnp.zeros((R, pad_cols), self.compute_dtype))
        if len(cols) > 1:
            patches = jnp.concatenate(cols, axis=1)                  # (R, Kp) bf16

        # --- row tiling: exact divisor of R when possible => no row pad, no out[:R] slice.
        tile_r = _choose_tile_r(R, self.tile_r_max)
        if tile_r is not None:
            Rp = R
        else:
            # Rare fallback: R has no multiple-of-8 divisor <= tile_r_max.
            tile_r = min(self.tile_r_max, _round_up(R, 128))
            Rp = _round_up(R, tile_r)
            patches = jnp.pad(patches, ((0, Rp - R), (0, 0)))

        # --- conv weight (E, C, kh, kw) -> (Kp, E); bias row appended when folded.
        w_rows = [self.proj_w.reshape(E, K).T]
        if fold_bias:
            w_rows.append(self.proj_b.reshape(1, E))
        if pad_cols > 0:
            w_rows.append(jnp.zeros((pad_cols, E), jnp.float32))
        w_full = (jnp.concatenate(w_rows, axis=0) if len(w_rows) > 1 else w_rows[0])
        w_full = w_full.astype(self.compute_dtype)

        # --- VMEM budget: real double-buffered footprint (+headroom), never the full chip.
        in_b = np.dtype(self.compute_dtype).itemsize
        out_b = np.dtype(self.out_dtype).itemsize
        need = (2 * tile_r * Kp * in_b          # double-buffered input tiles
                + 2 * tile_r * E * out_b        # double-buffered output tiles
                + Kp * E * in_b                 # resident weights
                + 4 * E * 4)                    # resident bias/gamma/beta (f32)
        vmem_limit = max(16 * 1024 * 1024,
                         min(2 * need, 48 * 1024 * 1024),
                         need + 4 * 1024 * 1024)

        # --- Pallas kernel: row-tiled matmul (+ folded bias) + LayerNorm.
        out = _proj_layernorm(
            patches, w_full,
            self.ln_gamma.reshape(1, E).astype(jnp.float32),
            self.ln_beta.reshape(1, E).astype(jnp.float32),
            bias=None if fold_bias else self.proj_b.reshape(1, E).astype(jnp.float32),
            tile_r=tile_r,
            out_dtype=self.out_dtype,
            vmem_limit_bytes=vmem_limit,
        )
        if Rp != R:
            out = out[:R]
        out = out.reshape(B, Ho * Wo, E)
        return out, Ho, Wo


# ------------------------------ Reference check ------------------------------
def _reference(x, mod):
    # Conv2d (NCHW) + flatten + transpose + LayerNorm, in plain f32 JAX.
    y = jax.lax.conv_general_dilated(
        x, mod.proj_w,
        window_strides=mod.stride,
        padding=[(mod.padding[0], mod.padding[0]), (mod.padding[1], mod.padding[1])],
        dimension_numbers=("NCHW", "OIHW", "NCHW"),
    ) + mod.proj_b[None, :, None, None]
    B, E, Ho, Wo = y.shape
    y = y.reshape(B, E, Ho * Wo).transpose(0, 2, 1)  # (B, N, E)
    mean = jnp.mean(y, axis=-1, keepdims=True)
    var = jnp.mean((y - mean) ** 2, axis=-1, keepdims=True)
    y = (y - mean) / jnp.sqrt(var + 1e-5)
    y = y * mod.ln_gamma + mod.ln_beta
    return y, Ho, Wo


if __name__ == "__main__":
    key = jax.random.PRNGKey(0)
    x_key, p_key, x2_key, p2_key = jax.random.split(key, 4)

    # --- Test 1: K=196 -> Kp=256 (bias folded into the matmul), exact-divisor tiling.
    B, C, H, W = 2, 4, 16, 16
    embed_dim = 32
    x = jax.random.normal(x_key, (B, C, H, W), dtype=jnp.float32)
    mod = OverlapPatchEmbed(img_size=H, patch_size=7, stride=4,
                            in_chans=C, embed_dim=embed_dim, key=p_key)
    out, Ho, Wo = mod(x)
    out = jax.block_until_ready(out)
    ref, Ho_ref, Wo_ref = _reference(x, mod)
    assert (Ho, Wo) == (Ho_ref, Wo_ref)
    assert out.shape == (B, Ho * Wo, embed_dim)
    # Matmul inputs run in bf16 (f32 accumulation) -> bf16-level tolerance vs f32 ref.
    assert jnp.allclose(out, ref, atol=5e-2, rtol=5e-2)

    # --- Test 2: K already a 128-multiple (explicit bias ref) + padded-row fallback.
    B2, C2 = 2, 8
    x2 = jax.random.normal(x2_key, (B2, C2, H, W), dtype=jnp.float32)
    mod2 = OverlapPatchEmbed(img_size=H, patch_size=4, stride=4,
                             in_chans=C2, embed_dim=embed_dim, key=p2_key)
    out2, Ho2, Wo2 = mod2(x2)
    out2 = jax.block_until_ready(out2)
    ref2, Ho2_ref, Wo2_ref = _reference(x2, mod2)
    assert (Ho2, Wo2) == (Ho2_ref, Wo2_ref)
    assert out2.shape == (B2, Ho2 * Wo2, embed_dim)
    assert jnp.allclose(out2, ref2, atol=5e-2, rtol=5e-2)

    print("KERNEL_OK")
</pallas_src>

<mosaic_0001>
module attributes {stable_mosaic.version = 11 : i64} {
  func.func @_proj_ln_kernel_folded(%arg0: i32, %arg1: memref<32x256xbf16, #tpu.memory_space<vmem>>, %arg2: memref<256x32xbf16, #tpu.memory_space<vmem>>, %arg3: memref<1x32xf32, #tpu.memory_space<vmem>>, %arg4: memref<1x32xf32, #tpu.memory_space<vmem>>, %arg5: memref<32x32xf32, #tpu.memory_space<vmem>>) attributes {dimension_semantics = [#tpu.dimension_semantics<parallel>], iteration_bounds = array<i64: 1>, scalar_prefetch = 0 : i64, scratch_operands = 0 : i64, tpu.core_type = #tpu.core_type<tc>, window_params = [{transform_indices = @transform_0, window_bounds = array<i64: 32, 256>}, {pipeline_mode = #tpu.pipeline_mode<synchronous>, transform_indices = @transform_1, window_bounds = array<i64: 256, 32>}, {pipeline_mode = #tpu.pipeline_mode<synchronous>, transform_indices = @transform_2, window_bounds = array<i64: 1, 32>}, {pipeline_mode = #tpu.pipeline_mode<synchronous>, transform_indices = @transform_3, window_bounds = array<i64: 1, 32>}, {transform_indices = @transform_4, window_bounds = array<i64: 32, 32>}]} {
    %c0 = arith.constant 0 : index
    %c0_0 = arith.constant 0 : index
    %0 = vector.load %arg1[%c0, %c0_0] : memref<32x256xbf16, #tpu.memory_space<vmem>>, vector<32x256xbf16>
    %c0_1 = arith.constant 0 : index
    %c0_2 = arith.constant 0 : index
    %1 = vector.load %arg2[%c0_1, %c0_2] : memref<256x32xbf16, #tpu.memory_space<vmem>>, vector<256x32xbf16>
    %cst = arith.constant dense<0.000000e+00> : vector<32x32xf32>
    %2 = tpu.matmul %0, %1, %cst {dimension_numbers = #tpu.dot_dimension_numbers<[1], [0], [0], [1], [0, 0, 1, 1], [], []>} : vector<32x256xbf16>, vector<256x32xbf16>, vector<32x32xf32> -> vector<32x32xf32>
    %c0_3 = arith.constant 0 : index
    %c0_4 = arith.constant 0 : index
    %3 = vector.load %arg3[%c0_3, %c0_4] : memref<1x32xf32, #tpu.memory_space<vmem>>, vector<1x32xf32>
    %c0_5 = arith.constant 0 : index
    %c0_6 = arith.constant 0 : index
    %4 = vector.load %arg4[%c0_5, %c0_6] : memref<1x32xf32, #tpu.memory_space<vmem>>, vector<1x32xf32>
    %cst_7 = arith.constant dense<0.000000e+00> : vector<32xf32>
    %5 = vector.multi_reduction <add>, %2, %cst_7 [1] : vector<32x32xf32> to vector<32xf32>
    %6 = vector.shape_cast %5 : vector<32xf32> to vector<32x1xf32>
    %cst_8 = arith.constant 3.125000e-02 : f32
    %7 = vector.broadcast %cst_8 : f32 to vector<32x1xf32>
    %8 = arith.mulf %6, %7 : vector<32x1xf32>
    %9 = vector.broadcast %8 : vector<32x1xf32> to vector<32x32xf32>
    %10 = arith.subf %2, %9 : vector<32x32xf32>
    %11 = arith.mulf %10, %10 : vector<32x32xf32>
    %cst_9 = arith.constant dense<0.000000e+00> : vector<32xf32>
    %12 = vector.multi_reduction <add>, %11, %cst_9 [1] : vector<32x32xf32> to vector<32xf32>
    %13 = vector.shape_cast %12 : vector<32xf32> to vector<32x1xf32>
    %cst_10 = arith.constant 3.125000e-02 : f32
    %14 = vector.broadcast %cst_10 : f32 to vector<32x1xf32>
    %15 = arith.mulf %13, %14 : vector<32x1xf32>
    %cst_11 = arith.constant 9.99999974E-6 : f32
    %16 = vector.broadcast %cst_11 : f32 to vector<32x1xf32>
    %17 = arith.addf %15, %16 : vector<32x1xf32>
    %18 = math.rsqrt %17 : vector<32x1xf32>
    %19 = vector.broadcast %18 : vector<32x1xf32> to vector<32x32xf32>
    %20 = arith.mulf %10, %19 : vector<32x32xf32>
    %21 = vector.broadcast %3 : vector<1x32xf32> to vector<32x32xf32>
    %22 = arith.mulf %20, %21 : vector<32x32xf32>
    %23 = vector.broadcast %4 : vector<1x32xf32> to vector<32x32xf32>
    %24 = arith.addf %22, %23 : vector<32x32xf32>
    %c0_12 = arith.constant 0 : index
    %c0_13 = arith.constant 0 : index
    %25 = vector.load %arg5[%c0_12, %c0_13] : memref<32x32xf32, #tpu.memory_space<vmem>>, vector<32x32xf32>
    tpu.vector_store %arg5[%c0_12, %c0_13], %24 {strides = array<i32>} : memref<32x32xf32, #tpu.memory_space<vmem>>, vector<32x32xf32>,
    return
  }
  func.func @transform_0(%arg0: i32) -> (i32, i32) {
    %c0_i32 = arith.constant 0 : i32
    %c0_i32_0 = arith.constant 0 : i32
    return %arg0, %c0_i32 : i32, i32
  }
  func.func @transform_1(%arg0: i32) -> (i32, i32) {
    %c0_i32 = arith.constant 0 : i32
    %c0_i32_0 = arith.constant 0 : i32
    %c0_i32_1 = arith.constant 0 : i32
    return %c0_i32, %c0_i32_0 : i32, i32
  }
  func.func @transform_2(%arg0: i32) -> (i32, i32) {
    %c0_i32 = arith.constant 0 : i32
    %c0_i32_0 = arith.constant 0 : i32
    %c0_i32_1 = arith.constant 0 : i32
    return %c0_i32, %c0_i32_0 : i32, i32
  }
  func.func @transform_3(%arg0: i32) -> (i32, i32) {
    %c0_i32 = arith.constant 0 : i32
    %c0_i32_0 = arith.constant 0 : i32
    %c0_i32_1 = arith.constant 0 : i32
    return %c0_i32, %c0_i32_0 : i32, i32
  }
  func.func @transform_4(%arg0: i32) -> (i32, i32) {
    %c0_i32 = arith.constant 0 : i32
    %c0_i32_0 = arith.constant 0 : i32
    return %arg0, %c0_i32 : i32, i32
  }
}

</mosaic_0001>

<llo_original>
// kernel: tpu_custom_call.1
$region0: #{tpu_custom_call.1}
  #allocation0 [shape = 'u32[]', space=smem, size = 0x4, offset = 0x4, fixed_abs, tag = 'smem constant byte address 0x4 - core index']
  #allocation1 [shape = 'u32[72,128]{1,0:T(1,128)}', space=vmem, size = 0x9000, scoped, tag = 'internal scratch']
  %s0 = inlined_call_operand.vmem [shape: bf16[32,256], index: 0, kind: input, shape index: {}]
  %s1 = inlined_call_operand.vmem [shape: bf16[256,32], index: 1, kind: input, shape index: {}]
  %s2 = inlined_call_operand.vmem [shape: f32[1,32], index: 2, kind: input, shape index: {}]
  %s3 = inlined_call_operand.vmem [shape: f32[1,32], index: 3, kind: input, shape index: {}]
  %s4 = inlined_call_operand.hbm [shape: f32[32,32], index: 4, kind: output, shape index: {}]
  %s5 = sld [smem:[#allocation0]]
  $region26: #{tpu_custom_call.1} parent=0
    _
  %s7 = ssub.s32 1, %s5
  %s8 = scalar_select 0, %s7, %s5
  $region1: #{tpu_custom_call.1} parent=0
    #allocation2 [shape = 'u8[16384]{0}', space=vmem, size = 0x4000, scoped, tag = 'output window, operand 0, single buffered']
    #allocation3 [shape = 's32[1]{0}', space=sflag, size = 0x4, scoped, tag = 'scoped memory for tpu_custom_call.1']
    %9 = vsyncpa [#allocation3], 0
    // Predicated region
    $region2: #{tpu_custom_call.1} parent=1 // pred_check
      _
    $region3: #{tpu_custom_call.1} parent=1 // pred_check_branch
      %11 = sbr.rel (0) target = $region5
    $region4: #{tpu_custom_call.1} parent=1 // pred_region
      _
    $region5: #{tpu_custom_call.1} parent=1 // pred_fallthru
      _
    // Predicated region
    $region6: #{tpu_custom_call.1} parent=1 // pred_check
      _
    $region7: #{tpu_custom_call.1} parent=1 // pred_check_branch
      %13 = sbr.rel (0) target = $region9
    $region8: #{tpu_custom_call.1} parent=1 // pred_region
      _
    $region9: #{tpu_custom_call.1} parent=1 // pred_fallthru
      _
    // Predicated region
    $region10: #{tpu_custom_call.1} parent=1 // pred_check
      _
    $region11: #{tpu_custom_call.1} parent=1 // pred_check_branch
      %15 = sbr.rel (0) target = $region13
    $region12: #{tpu_custom_call.1} parent=1 // pred_region
      _
    $region13: #{tpu_custom_call.1} parent=1 // pred_fallthru
      _
    // Predicated region
    $region14: #{tpu_custom_call.1} parent=1 // pred_check
      _
    $region15: #{tpu_custom_call.1} parent=1 // pred_check_branch
      %17 = sbr.rel (0) target = $region17
    $region16: #{tpu_custom_call.1} parent=1 // pred_region
      _
    $region17: #{tpu_custom_call.1} parent=1 // pred_fallthru
      _
    %v18 = vld [vmem:[%s0] sm:$0xff]
    %v19 = vld [vmem:[%s0 + $0x8] sm:$0xff]
    %v20 = vld [vmem:[%s0 + $0x10] sm:$0xff]
    %v21 = vld [vmem:[%s0 + $0x18] sm:$0xff]
    %v22 = vld [vmem:[%s1] sm:$0xf]
    %v23 = vld [vmem:[%s1 + $0x4] sm:$0xf]
    %v24 = vld [vmem:[%s1 + $0x8] sm:$0xf]
    %v25 = vld [vmem:[%s1 + $0xc] sm:$0xf]
    %v26 = vld [vmem:[%s1 + $0x10] sm:$0xf]
    %v27 = vld [vmem:[%s1 + $0x14] sm:$0xf]
    %v28 = vld [vmem:[%s1 + $0x18] sm:$0xf]
    %v29 = vld [vmem:[%s1 + $0x1c] sm:$0xf]
    %v30 = vld [vmem:[%s1 + $0x20] sm:$0xf]
    %v31 = vld [vmem:[%s1 + $0x24] sm:$0xf]
    %v32 = vld [vmem:[%s1 + $0x28] sm:$0xf]
    %v33 = vld [vmem:[%s1 + $0x2c] sm:$0xf]
    %v34 = vld [vmem:[%s1 + $0x30] sm:$0xf]
    %v35 = vld [vmem:[%s1 + $0x34] sm:$0xf]
    %v36 = vld [vmem:[%s1 + $0x38] sm:$0xf]
    %v37 = vld [vmem:[%s1 + $0x3c] sm:$0xf]
    %v38 = vld [vmem:[%s1 + $0x40] sm:$0xf]
    %v39 = vld [vmem:[%s1 + $0x44] sm:$0xf]
    %v40 = vld [vmem:[%s1 + $0x48] sm:$0xf]
    %v41 = vld [vmem:[%s1 + $0x4c] sm:$0xf]
    %v42 = vld [vmem:[%s1 + $0x50] sm:$0xf]
    %v43 = vld [vmem:[%s1 + $0x54] sm:$0xf]
    %v44 = vld [vmem:[%s1 + $0x58] sm:$0xf]
    %v45 = vld [vmem:[%s1 + $0x5c] sm:$0xf]
    %v46 = vld [vmem:[%s1 + $0x60] sm:$0xf]
    %v47 = vld [vmem:[%s1 + $0x64] sm:$0xf]
    %v48 = vld [vmem:[%s1 + $0x68] sm:$0xf]
    %v49 = vld [vmem:[%s1 + $0x6c] sm:$0xf]
    %v50 = vld [vmem:[%s1 + $0x70] sm:$0xf]
    %v51 = vld [vmem:[%s1 + $0x74] sm:$0xf]
    %v52 = vld [vmem:[%s1 + $0x78] sm:$0xf]
    %v53 = vld [vmem:[%s1 + $0x7c] sm:$0xf]
    %v58 = vunpack.c.l.b16 %v18
    %v59 = vunpack.c.h.b16 %v18
    %v60 = vunpack.c.l.b16 %v19
    %v61 = vunpack.c.h.b16 %v19
    %v62 = vunpack.c.l.b16 %v20
    %v63 = vunpack.c.h.b16 %v20
    %v64 = vunpack.c.l.b16 %v21
    %v65 = vunpack.c.h.b16 %v21
    %v66 = vpack.c.b16 %v60, %v58
    %v67 = vpack.c.b16 %v61, %v59
    %v68 = vpack.c.b16 %v64, %v62
    %v69 = vpack.c.b16 %v65, %v63
    %v106 = vunpack.c.l.b16 %v22
    %v107 = vunpack.c.l.b16 %v23
    %v108 = vunpack.c.l.b16 %v24
    %v109 = vunpack.c.l.b16 %v25
    %v110 = vunpack.c.l.b16 %v26
    %v111 = vunpack.c.l.b16 %v27
    %v112 = vunpack.c.l.b16 %v28
    %v113 = vunpack.c.l.b16 %v29
    %v114 = vunpack.c.l.b16 %v30
    %v115 = vunpack.c.l.b16 %v31
    %v116 = vunpack.c.l.b16 %v32
    %v117 = vunpack.c.l.b16 %v33
    %v118 = vunpack.c.l.b16 %v34
    %v119 = vunpack.c.l.b16 %v35
    %v120 = vunpack.c.l.b16 %v36
    %v121 = vunpack.c.l.b16 %v37
    %v122 = vunpack.c.l.b16 %v38
    %v123 = vunpack.c.l.b16 %v39
    %v124 = vunpack.c.l.b16 %v40
    %v125 = vunpack.c.l.b16 %v41
    %v126 = vunpack.c.l.b16 %v42
    %v127 = vunpack.c.l.b16 %v43
    %v128 = vunpack.c.l.b16 %v44
    %v129 = vunpack.c.l.b16 %v45
    %v130 = vunpack.c.l.b16 %v46
    %v131 = vunpack.c.l.b16 %v47
    %v132 = vunpack.c.l.b16 %v48
    %v133 = vunpack.c.l.b16 %v49
    %v134 = vunpack.c.l.b16 %v50
    %v135 = vunpack.c.l.b16 %v51
    %v136 = vunpack.c.l.b16 %v52
    %v137 = vunpack.c.l.b16 %v53
    %v138 = vpack.c.b16 %v107, %v106
    %v139 = vpack.c.b16 %v109, %v108
    %v140 = vpack.c.b16 %v111, %v110
    %v141 = vpack.c.b16 %v113, %v112
    %v142 = vpack.c.b16 %v115, %v114
    %v143 = vpack.c.b16 %v117, %v116
    %v144 = vpack.c.b16 %v119, %v118
    %v145 = vpack.c.b16 %v121, %v120
    %v146 = vpack.c.b16 %v123, %v122
    %v147 = vpack.c.b16 %v125, %v124
    %v148 = vpack.c.b16 %v127, %v126
    %v149 = vpack.c.b16 %v129, %v128
    %v150 = vpack.c.b16 %v131, %v130
    %v151 = vpack.c.b16 %v133, %v132
    %v152 = vpack.c.b16 %v135, %v134
    %v153 = vpack.c.b16 %v137, %v136
    %170 = vmatpush.bf16.msra.mxu0 %v145
    %171 = vmatpush.bf16.msra.mxu0 %v144
    %172 = vmatpush.bf16.msra.mxu0 %v143
    %173 = vmatpush.bf16.msra.mxu0 %v142
    %174 = vmatpush.bf16.msra.mxu0 %v141
    %175 = vmatpush.bf16.msra.mxu0 %v140
    %176 = vmatpush.bf16.msra.mxu0 %v139
    %177 = vmatpush.bf16.msra.mxu0 %v138
    %178 = vmatmul.bf16.gmra.mxu0 %v66
    %v179 = vpop.f32.mrf.mxu0
    %v180 = vadd.f32 0.0, %v179
    %v181 = vpop.f32.mrf.mxu0
    %v182 = vadd.f32 0.0, %v181
    %183 = vmatmul.bf16.gmra.mxu0 %v68
    %v184 = vpop.f32.mrf.mxu0
    %v185 = vadd.f32 0.0, %v184
    %v186 = vpop.f32.mrf.mxu0
    %v187 = vadd.f32 0.0, %v186
    %188 = vdwg.mxu0
    %189 = vmatpush.bf16.msra.mxu0 %v153
    %190 = vmatpush.bf16.msra.mxu0 %v152
    %191 = vmatpush.bf16.msra.mxu0 %v151
    %192 = vmatpush.bf16.msra.mxu0 %v150
    %193 = vmatpush.bf16.msra.mxu0 %v149
    %194 = vmatpush.bf16.msra.mxu0 %v148
    %195 = vmatpush.bf16.msra.mxu0 %v147
    %196 = vmatpush.bf16.msra.mxu0 %v146
    %197 = vmatmul.bf16.gmra.mxu0 %v67
    %v198 = vpop.f32.mrf.mxu0
    %v199 = vadd.f32 %v180, %v198
    %v200 = vpop.f32.mrf.mxu0
    %v201 = vadd.f32 %v182, %v200
    %202 = vmatmul.bf16.gmra.mxu0 %v69
    %v203 = vpop.f32.mrf.mxu0
    %v204 = vadd.f32 %v185, %v203
    %v205 = vpop.f32.mrf.mxu0
    %v206 = vadd.f32 %v187, %v205
    %207 = vdwg.mxu0
    %v208 = vld [vmem:[%s2] sm:$0x1]
    %v209 = vld [vmem:[%s3] sm:$0x1]
    %vm210 = vcmask 261120
    %v211 = vsel %vm210, %v199, 0.0
    %212 = vadd.xlane.f32.xlu0 %v211
    %v213 = vpop.xlane.xlu0 %212
    %v214 = vsel %vm210, %v201, 0.0
    %215 = vadd.xlane.f32.xlu0 %v214
    %v216 = vpop.xlane.xlu0 %215
    %v217 = vsel %vm210, %v204, 0.0
    %218 = vadd.xlane.f32.xlu0 %v217
    %v219 = vpop.xlane.xlu0 %218
    %v220 = vsel %vm210, %v206, 0.0
    %221 = vadd.xlane.f32.xlu0 %v220
    %v222 = vpop.xlane.xlu0 %221
    %v223 = vmul.f32 %v213, 0.03125
    %v224 = vmul.f32 %v216, 0.03125
    %v225 = vmul.f32 %v219, 0.03125
    %v226 = vmul.f32 %v222, 0.03125
    %v227 = vsub.f32 %v199, %v223
    %v228 = vsub.f32 %v201, %v224
    %v229 = vsub.f32 %v204, %v225
    %v230 = vsub.f32 %v206, %v226
    %v231 = vmul.f32 %v227, %v227
    %v232 = vmul.f32 %v228, %v228
    %v233 = vmul.f32 %v229, %v229
    %v234 = vmul.f32 %v230, %v230
    %v235 = vsel %vm210, %v231, 0.0
    %236 = vadd.xlane.f32.xlu0 %v235
    %v237 = vpop.xlane.xlu0 %236
    %v238 = vsel %vm210, %v232, 0.0
    %239 = vadd.xlane.f32.xlu0 %v238
    %v240 = vpop.xlane.xlu0 %239
    %v241 = vsel %vm210, %v233, 0.0
    %242 = vadd.xlane.f32.xlu0 %v241
    %v243 = vpop.xlane.xlu0 %242
    %v244 = vsel %vm210, %v234, 0.0
    %245 = vadd.xlane.f32.xlu0 %v244
    %v246 = vpop.xlane.xlu0 %245
    %v247 = vmul.f32 %v237, 0.03125
    %v248 = vmul.f32 %v240, 0.03125
    %v249 = vmul.f32 %v243, 0.03125
    %v250 = vmul.f32 %v246, 0.03125
    %v251 = vadd.f32 %v247, 1e-05
    %v252 = vadd.f32 %v248, 1e-05
    %v253 = vadd.f32 %v249, 1e-05
    %v254 = vadd.f32 %v250, 1e-05
    %v255 = vrsqrt.pop %v251
    %v256 = vmul.f32 %v255, %v251
    %v257 = vmul.f32 %v256, %v255
    %v258 = vmul.f32 0.5, %v257
    %v259 = vsub.f32 1.5, %v258
    %v260 = vmul.f32 %v255, %v259
    %vm261 = vweird.f32 %v251
    %vm262 = vweird.f32 %v255
    %vm263 = vmor %vm261, %vm262
    %v264 = vsel %vm263, %v255, %v260
    %v265 = vrsqrt.pop %v252
    %v266 = vmul.f32 %v265, %v252
    %v267 = vmul.f32 %v266, %v265
    %v268 = vmul.f32 0.5, %v267
    %v269 = vsub.f32 1.5, %v268
    %v270 = vmul.f32 %v265, %v269
    %vm271 = vweird.f32 %v252
    %vm272 = vweird.f32 %v265
    %vm273 = vmor %vm271, %vm272
    %v274 = vsel %vm273, %v265, %v270
    %v275 = vrsqrt.pop %v253
    %v276 = vmul.f32 %v275, %v253
    %v277 = vmul.f32 %v276, %v275
    %v278 = vmul.f32 0.5, %v277
    %v279 = vsub.f32 1.5, %v278
    %v280 = vmul.f32 %v275, %v279
    %vm281 = vweird.f32 %v253
    %vm282 = vweird.f32 %v275
    %vm283 = vmor %vm281, %vm282
    %v284 = vsel %vm283, %v275, %v280
    %v285 = vrsqrt.pop %v254
    %v286 = vmul.f32 %v285, %v254
    %v287 = vmul.f32 %v286, %v285
    %v288 = vmul.f32 0.5, %v287
    %v289 = vsub.f32 1.5, %v288
    %v290 = vmul.f32 %v285, %v289
    %vm291 = vweird.f32 %v254
    %vm292 = vweird.f32 %v285
    %vm293 = vmor %vm291, %vm292
    %v294 = vsel %vm293, %v285, %v290
    %v295 = vmul.f32 %v227, %v264
    %v296 = vmul.f32 %v228, %v274
    %v297 = vmul.f32 %v229, %v284
    %v298 = vmul.f32 %v230, %v294
    %v300 = vperm.slane %v208, 0
    %v302 = vmul.f32 %v295, %v300
    %v303 = vmul.f32 %v296, %v300
    %v304 = vmul.f32 %v297, %v300
    %v305 = vmul.f32 %v298, %v300
    %v307 = vperm.slane %v209, 0
    %v309 = vadd.f32 %v302, %v307
    %v310 = vadd.f32 %v303, %v307
    %v311 = vadd.f32 %v304, %v307
    %v312 = vadd.f32 %v305, %v307
    %313 = vst.msk [vmem:[#allocation2] sm:$0xff] %vm210, %v309
    %314 = vst.msk [vmem:[#allocation2 + $0x8] sm:$0xff] %vm210, %v310
    %315 = vst.msk [vmem:[#allocation2 + $0x10] sm:$0xff] %vm210, %v311
    %316 = vst.msk [vmem:[#allocation2 + $0x18] sm:$0xff] %vm210, %v312
    // Predicated region
    $region18: #{tpu_custom_call.1} parent=1 // pred_check
      _
    $region19: #{tpu_custom_call.1} parent=1 // pred_check_branch
      %318 = sbr.rel (0) target = $region21
    $region20: #{tpu_custom_call.1} parent=1 // pred_region
      %320 = vsyncadd [#allocation3], 0
      %s321 = sshll.u32 [#allocation2], 4
      %s322 = int_to_ptr.vmem [resolvable:$true] %s321
      %s323 = sshll.u32 %s4, 4
      %s324 = int_to_ptr.hbm [resolvable:$true] %s323
      %329 = dma.vmem_to_hbm [thread:$0]  %s322, 512, %s324, [#allocation3], 128, 128, 8
    $region21: #{tpu_custom_call.1} parent=1 // pred_fallthru
      _
    // Predicated region
    $region22: #{tpu_custom_call.1} parent=1 // pred_check
      _
    $region23: #{tpu_custom_call.1} parent=1 // pred_check_branch
      %331 = sbr.rel (0) target = $region25
    $region24: #{tpu_custom_call.1} parent=1 // pred_region
      %333 = dma.done [#allocation3], 512
    $region25: #{tpu_custom_call.1} parent=1 // pred_fallthru
      _
    %334 = vsyncpa [#allocation3], 1

</llo_original>
